<compile_context>
chip_gen: v7x
topology: tpu7x:2x2x1
jax: 0.10.0
libtpu: 0.0.40
codegen_flags: <defaults>
</compile_context>

<pallas_src>
import functools
import math

import jax
import jax.numpy as jnp
from jax.experimental import pallas as pl
from jax.experimental.pallas import tpu as pltpu


def _mlp_kernel(x_ref, w1_ref, b1_ref, w2_ref, b2_ref, o_ref, h_scratch):
    # Hidden activations depend only on the row tile (grid axis 0).  Compute
    # them once per row tile, on the first (qkv, col) step, and keep them
    # resident in VMEM scratch (bf16) for the remaining column tiles.
    @pl.when((pl.program_id(1) == 0) & (pl.program_id(2) == 0))
    def _():
        h = jnp.dot(x_ref[...], w1_ref[...], preferred_element_type=jnp.float32)
        h = jnp.maximum(h + b1_ref[...], 0.0)          # bias + ReLU in f32
        h_scratch[...] = h.astype(h_scratch.dtype)     # bf16 for the MXU

    out = jnp.dot(h_scratch[...], w2_ref[...], preferred_element_type=jnp.float32)
    o_ref[...] = (out + b2_ref[...]).astype(o_ref.dtype)


def _round_up(x, m):
    return ((x + m - 1) // m) * m


def _vmem_bytes(tm, tn, d_model, d_hidden, out_itemsize):
    """Estimated pipelined VMEM footprint (double-buffered inputs/outputs + scratch)."""
    return (
        2 * tm * d_model * 4          # X row tiles (f32)
        + 2 * d_model * d_hidden * 4  # W1 (f32, fetched once, still 2 bufs)
        + 2 * d_hidden * 4            # b1 (f32)
        + 2 * d_hidden * tn * 2       # W2 column tiles (bf16)
        + 2 * tn * 4                  # b2 column tiles (f32)
        + 2 * tm * tn * out_itemsize  # output tiles
        + tm * d_hidden * 2           # hidden scratch (bf16)
    )


def _plan_tiles(M, d_model, d_hidden, P, out_itemsize, vmem_budget):
    """Pick (tm, tn): lane-dense column tiles within one q/k/v slab, and the
    largest row tile that fits the VMEM budget while leaving >= 2 row tiles
    (so both v7x TensorCores get work when M is large)."""
    # Column tile: largest multiple-of-128 tile that divides P; falling back
    # to the full slab width P is always layout-legal (block == full last dim).
    tn = P
    for c in (2048, 1024, 512, 256, 128):
        if c <= P and P % c == 0:
            tn = c
            break

    fit = vmem_budget // 2  # headroom for compiler temporaries / spills
    # Shrink tn first if even a minimal row tile cannot fit.
    while _vmem_bytes(16, tn, d_model, d_hidden, out_itemsize) > fit \
            and tn > 128 and tn % 256 == 0:
        tn //= 2

    tm = None
    for c in (2048, 1024, 512, 256, 128, 64, 32, 16):
        if M > 256 and c >= M:
            # Keep >= 2 row tiles so the "parallel" row axis feeds both v7x TCs.
            continue
        if _vmem_bytes(c, tn, d_model, d_hidden, out_itemsize) <= fit:
            tm = c
            break
    if tm is None:
        tm = 16
    # Don't allocate blocks bigger than the (sublane-rounded) problem.
    tm = min(tm, _round_up(M, 16))
    return tm, tn


def prepare_params(params):
    """One-time preparation (call OUTSIDE the jitted forward):
    - splits the second-layer weight/bias into per-projection (q/k/v) slabs,
    - pre-casts the big W2 to bf16 so the cast is not a per-call HBM pass.
    W1/b1/b2 stay f32 (the first matmul is tiny; keeping it f32 is free)."""
    w1, b1, w2, b2 = params["w1"], params["b1"], params["w2"], params["b2"]
    d_hidden, d_out = w2.shape
    assert d_out % 3 == 0
    P = d_out // 3
    # d_out is laid out as [3, H, attn, d_model] flattened -> contiguous slabs of P.
    w2_qkv = jnp.transpose(w2.reshape(d_hidden, 3, P), (1, 0, 2)).astype(jnp.bfloat16)
    b2_qkv = b2.reshape(3, 1, P).astype(jnp.float32)
    return {
        "w1": w1.astype(jnp.float32),
        "b1": b1.reshape(1, d_hidden).astype(jnp.float32),
        "w2_qkv": w2_qkv,
        "b2_qkv": b2_qkv,
    }


@functools.partial(jax.jit, static_argnames=("num_heads", "out_dtype"))
def meta_learner_forward(inputs, prepared, num_heads, out_dtype=jnp.bfloat16):
    """inputs: (B, S, N, d_model) f32 -> (3, B, S, N, H, attn, d_model) out_dtype."""
    w1, b1 = prepared["w1"], prepared["b1"]
    w2, b2 = prepared["w2_qkv"], prepared["b2_qkv"]
    B, S, N, d_model = inputs.shape
    attn_size = d_model // num_heads
    d_hidden = w1.shape[1]
    P = w2.shape[2]                               # per-projection (q/k/v) width
    assert P == num_heads * attn_size * d_model
    M = B * S * N
    out_itemsize = jnp.dtype(out_dtype).itemsize

    # Generation-aware VMEM budget (v7x has 64 MiB/TC vs 128 MiB on v5e/v6e).
    try:
        vmem_cap = pltpu.get_tpu_info().vmem_capacity_bytes
    except Exception:
        vmem_cap = 64 * 2**20                     # conservative (v7x per-TC)
    vmem_budget = int(0.85 * vmem_cap)

    tm, tn = _plan_tiles(M, d_model, d_hidden, P, out_itemsize, vmem_budget)
    cpb = P // tn                                 # column tiles per q/k/v slab
    num_m_tiles = pl.cdiv(M, tm)                  # partial last tile is masked
    grid = (num_m_tiles, 3, cpb)

    vmem_needed = _vmem_bytes(tm, tn, d_model, d_hidden, out_itemsize)
    vmem_limit = int(min(vmem_budget, max(32 * 2**20, 2 * vmem_needed)))

    x2d = inputs.reshape(M, d_model).astype(jnp.float32)

    cost = pl.CostEstimate(
        flops=2 * M * d_model * d_hidden + 2 * M * d_hidden * 3 * P,
        transcendentals=0,
        bytes_accessed=(
            M * d_model * 4 + d_model * d_hidden * 4 + d_hidden * 4
            + num_m_tiles * (d_hidden * 3 * P * 2 + 3 * P * 4)   # W2/b2 re-streamed per row tile
            + 3 * M * P * out_itemsize                           # output write
        ),
    )

    out3d = pl.pallas_call(
        _mlp_kernel,
        out_shape=jax.ShapeDtypeStruct((3, M, P), out_dtype),
        grid_spec=pltpu.PrefetchScalarGridSpec(
            num_scalar_prefetch=0,
            grid=grid,
            in_specs=[
                pl.BlockSpec((tm, d_model), lambda i, q, j: (i, 0)),           # X row tile
                pl.BlockSpec((d_model, d_hidden), lambda i, q, j: (0, 0)),     # W1 (full)
                pl.BlockSpec((1, d_hidden), lambda i, q, j: (0, 0)),           # b1 (full)
                pl.BlockSpec((None, d_hidden, tn), lambda i, q, j: (q, 0, j)),  # W2 slab col tile
                pl.BlockSpec((None, 1, tn), lambda i, q, j: (q, 0, j)),        # b2 slab col tile
            ],
            # qkv axis folded into the output placement -> no post-kernel transpose.
            out_specs=pl.BlockSpec((None, tm, tn), lambda i, q, j: (q, i, j)),
            scratch_shapes=[pltpu.VMEM((tm, d_hidden), jnp.bfloat16)],
        ),
        compiler_params=pltpu.CompilerParams(
            # Row tiles are independent (hidden recomputed per row tile), so the
            # leading axis can be sharded across v7x TensorCores; the two column
            # axes must stay sequential because they reuse the hidden scratch.
            dimension_semantics=("parallel", "arbitrary", "arbitrary"),
            vmem_limit_bytes=vmem_limit,
        ),
        cost_estimate=cost,
    )(x2d, w1, b1, w2, b2)

    # Pure metadata reshape: (3, M, P) -> (3, B, S, N, H, attn, d_model).
    return out3d.reshape(3, B, S, N, num_heads, attn_size, d_model)


def init_params(key, d_model, d_hidden_mt, num_heads):
    """Deterministic init mirroring nn.Linear's uniform(-1/sqrt(fan_in), 1/sqrt(fan_in))."""
    attn_size = d_model // num_heads
    d_out = 3 * num_heads * attn_size * d_model
    k1, k2, k3, k4 = jax.random.split(key, 4)
    lim1 = 1.0 / math.sqrt(d_model)
    lim2 = 1.0 / math.sqrt(d_hidden_mt)
    # Stored transposed vs. PyTorch: (in, out) so the kernel does X @ W.
    w1 = jax.random.uniform(k1, (d_model, d_hidden_mt), jnp.float32, -lim1, lim1)
    b1 = jax.random.uniform(k2, (d_hidden_mt,), jnp.float32, -lim1, lim1)
    w2 = jax.random.uniform(k3, (d_hidden_mt, d_out), jnp.float32, -lim2, lim2)
    b2 = jax.random.uniform(k4, (d_out,), jnp.float32, -lim2, lim2)
    return {"w1": w1, "b1": b1, "w2": w2, "b2": b2}


def _reference_forward(inputs, params, num_heads):
    """Pure f32 JAX reference matching the PyTorch module semantics."""
    B, S, N, d_model = inputs.shape
    attn_size = d_model // num_heads
    h = jnp.maximum(inputs @ params["w1"] + params["b1"], 0.0)
    o = h @ params["w2"] + params["b2"]
    o = o.reshape(B, S, N, 3, num_heads, attn_size, d_model)
    return jnp.transpose(o, (3, 0, 1, 2, 4, 5, 6))


if __name__ == "__main__":
    # Small shapes consistent with the module's forward.
    batch, seq_len, num_nodes = 2, 4, 4
    d_model, d_hidden_mt, num_heads = 16, 32, 4

    key = jax.random.PRNGKey(0)
    k_in, k_par = jax.random.split(key)
    inputs = jax.random.normal(k_in, (batch, seq_len, num_nodes, d_model), jnp.float32)
    params = init_params(k_par, d_model, d_hidden_mt, num_heads)
    prepared = prepare_params(params)   # one-time: qkv slab split + W2 bf16 cast

    out = meta_learner_forward(inputs, prepared, num_heads=num_heads)
    out = jax.block_until_ready(out)

    ref = _reference_forward(inputs, params, num_heads)
    assert out.shape == (3, batch, seq_len, num_nodes, num_heads,
                         d_model // num_heads, d_model), out.shape
    # bf16 second matmul + bf16 output vs. pure f32 reference -> relaxed
    # tolerance; a layout/indexing bug would give O(0.1..1) errors and fail.
    out_f32 = out.astype(jnp.float32)
    assert jnp.allclose(out_f32, ref, atol=5e-2, rtol=5e-2), \
        float(jnp.max(jnp.abs(out_f32 - ref)))

    print("KERNEL_OK")
</pallas_src>

<mosaic_0001>
module attributes {stable_mosaic.version = 11 : i64} {
  func.func @_mlp_kernel(%arg0: i32, %arg1: i32, %arg2: i32, %arg3: memref<32x16xf32, #tpu.memory_space<vmem>>, %arg4: memref<16x32xf32, #tpu.memory_space<vmem>>, %arg5: memref<1x32xf32, #tpu.memory_space<vmem>>, %arg6: memref<1x32x256xbf16, #tpu.memory_space<vmem>>, %arg7: memref<1x1x256xf32, #tpu.memory_space<vmem>>, %arg8: memref<1x32x256xbf16, #tpu.memory_space<vmem>>, %arg9: memref<32x32xbf16, #tpu.memory_space<vmem>>) attributes {dimension_semantics = [#tpu.dimension_semantics<parallel>, #tpu.dimension_semantics<arbitrary>, #tpu.dimension_semantics<arbitrary>], iteration_bounds = array<i64: 1, 3, 1>, scalar_prefetch = 0 : i64, scratch_operands = 1 : i64, tpu.core_type = #tpu.core_type<tc>, window_params = [{transform_indices = @transform_0, window_bounds = array<i64: 32, 16>}, {pipeline_mode = #tpu.pipeline_mode<synchronous>, transform_indices = @transform_1, window_bounds = array<i64: 16, 32>}, {pipeline_mode = #tpu.pipeline_mode<synchronous>, transform_indices = @transform_2, window_bounds = array<i64: 1, 32>}, {transform_indices = @transform_3, window_bounds = array<i64: 1, 32, 256>}, {transform_indices = @transform_4, window_bounds = array<i64: 1, 1, 256>}, {transform_indices = @transform_5, window_bounds = array<i64: 1, 32, 256>}]} {
    %c0_i32 = arith.constant 0 : i32
    %0 = arith.cmpi eq, %arg1, %c0_i32 : i32
    %c0_i32_0 = arith.constant 0 : i32
    %1 = arith.cmpi eq, %arg2, %c0_i32_0 : i32
    %2 = arith.andi %0, %1 : i1
    %3 = arith.extui %2 : i1 to i32
    %c0_i32_1 = arith.constant 0 : i32
    %4 = arith.cmpi ne, %3, %c0_i32_1 : i32
    scf.if %4 {
      %c0_12 = arith.constant 0 : index
      %c0_13 = arith.constant 0 : index
      %17 = vector.load %arg3[%c0_12, %c0_13] : memref<32x16xf32, #tpu.memory_space<vmem>>, vector<32x16xf32>
      %c0_14 = arith.constant 0 : index
      %c0_15 = arith.constant 0 : index
      %18 = vector.load %arg4[%c0_14, %c0_15] : memref<16x32xf32, #tpu.memory_space<vmem>>, vector<16x32xf32>
      %cst_16 = arith.constant dense<0.000000e+00> : vector<32x32xf32>
      %19 = tpu.matmul %17, %18, %cst_16 {dimension_numbers = #tpu.dot_dimension_numbers<[1], [0], [0], [1], [0, 0, 1, 1], [], []>} : vector<32x16xf32>, vector<16x32xf32>, vector<32x32xf32> -> vector<32x32xf32>
      %c0_17 = arith.constant 0 : index
      %c0_18 = arith.constant 0 : index
      %20 = vector.load %arg5[%c0_17, %c0_18] : memref<1x32xf32, #tpu.memory_space<vmem>>, vector<1x32xf32>
      %21 = vector.broadcast %20 : vector<1x32xf32> to vector<32x32xf32>
      %22 = arith.addf %19, %21 : vector<32x32xf32>
      %cst_19 = arith.constant 0.000000e+00 : f32
      %23 = vector.broadcast %cst_19 : f32 to vector<32x32xf32>
      %24 = arith.maximumf %22, %23 : vector<32x32xf32>
      %25 = arith.truncf %24 : vector<32x32xf32> to vector<32x32xbf16>
      %c0_20 = arith.constant 0 : index
      %c0_21 = arith.constant 0 : index
      %26 = vector.load %arg9[%c0_20, %c0_21] : memref<32x32xbf16, #tpu.memory_space<vmem>>, vector<32x32xbf16>
      tpu.vector_store %arg9[%c0_20, %c0_21], %25 {strides = array<i32>} : memref<32x32xbf16, #tpu.memory_space<vmem>>, vector<32x32xbf16>,
    } else {
    }
    %c0 = arith.constant 0 : index
    %c0_2 = arith.constant 0 : index
    %5 = vector.load %arg9[%c0, %c0_2] : memref<32x32xbf16, #tpu.memory_space<vmem>>, vector<32x32xbf16>
    %c0_3 = arith.constant 0 : index
    %c0_4 = arith.constant 0 : index
    %c0_5 = arith.constant 0 : index
    %6 = vector.load %arg6[%c0_3, %c0_4, %c0_5] : memref<1x32x256xbf16, #tpu.memory_space<vmem>>, vector<1x32x256xbf16>
    %7 = vector.shape_cast %6 : vector<1x32x256xbf16> to vector<32x256xbf16>
    %cst = arith.constant dense<0.000000e+00> : vector<32x256xf32>
    %8 = tpu.matmul %5, %7, %cst {dimension_numbers = #tpu.dot_dimension_numbers<[1], [0], [0], [1], [0, 0, 1, 1], [], []>} : vector<32x32xbf16>, vector<32x256xbf16>, vector<32x256xf32> -> vector<32x256xf32>
    %c0_6 = arith.constant 0 : index
    %c0_7 = arith.constant 0 : index
    %c0_8 = arith.constant 0 : index
    %9 = vector.load %arg7[%c0_6, %c0_7, %c0_8] : memref<1x1x256xf32, #tpu.memory_space<vmem>>, vector<1x1x256xf32>
    %10 = vector.shape_cast %9 : vector<1x1x256xf32> to vector<1x256xf32>
    %11 = vector.broadcast %10 : vector<1x256xf32> to vector<32x256xf32>
    %12 = arith.addf %8, %11 : vector<32x256xf32>
    %13 = arith.truncf %12 : vector<32x256xf32> to vector<32x256xbf16>
    %c0_9 = arith.constant 0 : index
    %c0_10 = arith.constant 0 : index
    %c0_11 = arith.constant 0 : index
    %14 = vector.load %arg8[%c0_9, %c0_10, %c0_11] : memref<1x32x256xbf16, #tpu.memory_space<vmem>>, vector<1x32x256xbf16>
    %15 = vector.shape_cast %14 : vector<1x32x256xbf16> to vector<32x256xbf16>
    %16 = vector.shape_cast %13 : vector<32x256xbf16> to vector<1x32x256xbf16>
    tpu.vector_store %arg8[%c0_9, %c0_10, %c0_11], %16 {strides = array<i32>} : memref<1x32x256xbf16, #tpu.memory_space<vmem>>, vector<1x32x256xbf16>,
    return
  }
  func.func @transform_0(%arg0: i32, %arg1: i32, %arg2: i32) -> (i32, i32) {
    %c0_i32 = arith.constant 0 : i32
    %c0_i32_0 = arith.constant 0 : i32
    return %arg0, %c0_i32 : i32, i32
  }
  func.func @transform_1(%arg0: i32, %arg1: i32, %arg2: i32) -> (i32, i32) {
    %c0_i32 = arith.constant 0 : i32
    %c0_i32_0 = arith.constant 0 : i32
    %c0_i32_1 = arith.constant 0 : i32
    return %c0_i32, %c0_i32_0 : i32, i32
  }
  func.func @transform_2(%arg0: i32, %arg1: i32, %arg2: i32) -> (i32, i32) {
    %c0_i32 = arith.constant 0 : i32
    %c0_i32_0 = arith.constant 0 : i32
    %c0_i32_1 = arith.constant 0 : i32
    return %c0_i32, %c0_i32_0 : i32, i32
  }
  func.func @transform_3(%arg0: i32, %arg1: i32, %arg2: i32) -> (i32, i32, i32) {
    %c0_i32 = arith.constant 0 : i32
    %c0_i32_0 = arith.constant 0 : i32
    return %arg1, %c0_i32, %arg2 : i32, i32, i32
  }
  func.func @transform_4(%arg0: i32, %arg1: i32, %arg2: i32) -> (i32, i32, i32) {
    %c0_i32 = arith.constant 0 : i32
    %c0_i32_0 = arith.constant 0 : i32
    return %arg1, %c0_i32, %arg2 : i32, i32, i32
  }
  func.func @transform_5(%arg0: i32, %arg1: i32, %arg2: i32) -> (i32, i32, i32) {
    %c0_i32 = arith.constant 0 : i32
    return %arg1, %arg0, %arg2 : i32, i32, i32
  }
}

</mosaic_0001>

<llo_original>
// kernel: meta_learner_forward.1
$region0: #{meta_learner_forward.1}
  #allocation0 [shape = 'u32[]', space=smem, size = 0x4, offset = 0x4, fixed_abs, tag = 'smem constant byte address 0x4 - core index']
  #allocation1 [shape = 'u32[144,128]{1,0:T(1,128)}', space=vmem, size = 0x12000, scoped, tag = 'internal scratch']
  #allocation2 [shape = 'bf16[32,32]{1,0:T(16,128)(2,1)}', space=vmem, size = 0x2000, scoped, tag = 'scratch operand']
  %s0 = inlined_call_operand.hbm [shape: f32[32,16], index: 0, kind: input, shape index: {}]
  %s1 = inlined_call_operand.hbm [shape: f32[16,32], index: 1, kind: input, shape index: {}]
  %s2 = inlined_call_operand.vmem [shape: f32[1,32], index: 2, kind: input, shape index: {}]
  %s3 = inlined_call_operand.hbm [shape: bf16[3,32,256], index: 3, kind: input, shape index: {}]
  %s4 = inlined_call_operand.vmem [shape: f32[3,1,256], index: 4, kind: input, shape index: {}]
  %s5 = inlined_call_operand.vmem [shape: bf16[3,32,256], index: 5, kind: output, shape index: {}]
  %s6 = sld [smem:[#allocation0]]
  $region69: #{meta_learner_forward.1} parent=0
    _
  %s8 = ssub.s32 1, %s6
  %s9 = scalar_select 0, %s8, %s6
  $region1: #{meta_learner_forward.1} parent=0
    #allocation3 [shape = 'u8[16384]{0}', space=vmem, size = 0x4000, scoped, tag = 'input window, operand 0, single buffered']
    #allocation4 [shape = 's32[2]{0}', space=sflag, size = 0x8, scoped, tag = 'scoped memory for meta_learner_forward.1']
    #allocation5 [shape = 'u8[8192]{0}', space=vmem, size = 0x2000, scoped, tag = 'input window, operand 1, single buffered']
    #allocation6 [shape = 's32[1]{0}', space=sflag, size = 0x4, scoped, tag = 'scoped memory for meta_learner_forward.1']
    #allocation7 [shape = 'u8[32768]{0}', space=vmem, size = 0x8000, scoped, tag = 'input window, operand 3']
    %10 = vsyncpa [#allocation4], 0
    %11 = vsyncpa [#allocation6], 0
    loop: start=0, step=1, limit=5
    $region2: #{meta_learner_forward.1} parent=1 // loop_pre_header
      _
    $region3: #{meta_learner_forward.1} parent=1 // loop_header
      %s13 = sphi 0, %s17
      %p14 = scmp.ge.s32.totalorder %s13, 5
      %s20 = sphi 0, %s39
      %s21 = sphi 0, %s35
      %s22 = sphi 0, %s31
      %s23 = sphi 0, %s20
      %s24 = sphi 0, %s21
      %s25 = sphi 0, %s22
      %s26 = sphi 0, %s23
      %s27 = sphi 0, %s24
      %s28 = sphi 0, %s25
      %s42 = sphi 0, %s44
      %s45 = sphi 0, %s42
      %s46 = sphi 0, %s45
      %s62 = sphi 0, %s46
      %s66 = sphi 0, %s66
      %s68 = sphi 0, %s66
      %s69 = sphi 0, %s68
      %s83 = sphi 0, %s69
      %s87 = sphi 0, %s87
      %s89 = sphi 0, %s87
      %s90 = sphi 0, %s89
      %s104 = sphi 0, %s90
      %s112 = sphi 0, %s114
      %s115 = sphi 0, %s112
      %s116 = sphi 0, %s115
      %s132 = sphi 0, %s116
      %s140 = sphi 0, %s142
      %s143 = sphi 0, %s140
      %s144 = sphi 0, %s143
      %s160 = sphi 0, %s144
      %s170 = sphi 0, %s172
      %s173 = sphi 0, %s170
      %s174 = sphi 0, %s173
      %s190 = sphi 0, %s174
    $region4: #{meta_learner_forward.1} parent=1 // loop_header_branch
      %16 = sbr.rel (%p14) target = $region8
    $region5: #{meta_learner_forward.1} parent=1 // loop_body
      %s18 = ssub.s32 %s13, 1
      %s19 = ssub.s32 %s13, 2
      %s29 = sadd.s32 1, %s22
      %p30 = scmp.ge.s32.totalorder %s29, 1
      %s31 = scalar_select %p30, 0, %s29
      %s32 = sadd.s32 1, %s21
      %s33 = scalar_select %p30, %s32, %s21
      %p34 = scmp.ge.s32.totalorder %s33, 3
      %s35 = scalar_select %p34, 0, %s33
      %s36 = sadd.s32 1, %s20
      %s37 = scalar_select %p34, %s36, %s20
      %p38 = scmp.ge.s32.totalorder %s37, 1
      %s39 = scalar_select %p38, 0, %s37
      %s40 = ssub.s32 %s20, %s39
      %p41 = scmp.eq.s32.totalorder %s40, 0
      %s43 = sadd.s32 %s42, 1
      %s44 = scalar_select %p41, %s42, %s43
      %p47 = pneg %p41
      %p48 = scmp.eq.s32.totalorder %s13, 2
      %p49 = por %p47, %p48
      %p50 = scmp.ne.s32.totalorder %s42, %s45
      %p51 = scmp.eq.s32.totalorder %s13, 0
      %p52 = por %p50, %p51
      %p53 = scmp.ne.s32.totalorder %s42, %s45
      %p54 = scmp.eq.s32.totalorder %s18, 2
      %p55 = por %p53, %p54
      %p56 = scmp.ne.s32.totalorder %s45, %s46
      %p57 = scmp.eq.s32.totalorder %s18, 0
      %p58 = por %p56, %p57
      %p59 = scmp.ne.s32.totalorder %s45, %s46
      %p60 = scmp.eq.s32.totalorder %s19, 2
      %p61 = por %p59, %p60
      %p63 = scmp.ne.s32.totalorder %s46, %s62
      %p64 = scmp.eq.s32.totalorder %s19, 0
      %p65 = por %p63, %p64
      %s67 = sadd.s32 %s66, 1
      %p70 = scmp.eq.s32.totalorder %s13, 2
      %p71 = scmp.ne.s32.totalorder %s66, %s68
      %p72 = scmp.eq.s32.totalorder %s13, 0
      %p73 = por %p71, %p72
      %p74 = scmp.ne.s32.totalorder %s66, %s68
      %p75 = scmp.eq.s32.totalorder %s18, 2
      %p76 = por %p74, %p75
      %p77 = scmp.ne.s32.totalorder %s68, %s69
      %p78 = scmp.eq.s32.totalorder %s18, 0
      %p79 = por %p77, %p78
      %p80 = scmp.ne.s32.totalorder %s68, %s69
      %p81 = scmp.eq.s32.totalorder %s19, 2
      %p82 = por %p80, %p81
      %p84 = scmp.ne.s32.totalorder %s69, %s83
      %p85 = scmp.eq.s32.totalorder %s19, 0
      %p86 = por %p84, %p85
      %s88 = sadd.s32 %s87, 1
      %p91 = scmp.eq.s32.totalorder %s13, 2
      %p92 = scmp.ne.s32.totalorder %s87, %s89
      %p93 = scmp.eq.s32.totalorder %s13, 0
      %p94 = por %p92, %p93
      %p95 = scmp.ne.s32.totalorder %s87, %s89
      %p96 = scmp.eq.s32.totalorder %s18, 2
      %p97 = por %p95, %p96
      %p98 = scmp.ne.s32.totalorder %s89, %s90
      %p99 = scmp.eq.s32.totalorder %s18, 0
      %p100 = por %p98, %p99
      %p101 = scmp.ne.s32.totalorder %s89, %s90
      %p102 = scmp.eq.s32.totalorder %s19, 2
      %p103 = por %p101, %p102
      %p105 = scmp.ne.s32.totalorder %s90, %s104
      %p106 = scmp.eq.s32.totalorder %s19, 0
      %p107 = por %p105, %p106
      %s108 = ssub.s32 %s21, %s35
      %s109 = ssub.s32 %s22, %s31
      %s110 = sor.u32 %s108, %s109
      %p111 = scmp.eq.s32.totalorder %s110, 0
      %s113 = sadd.s32 %s112, 1
      %s114 = scalar_select %p111, %s112, %s113
      %p117 = pneg %p111
      %p118 = scmp.eq.s32.totalorder %s13, 2
      %p119 = por %p117, %p118
      %p120 = scmp.ne.s32.totalorder %s112, %s115
      %p121 = scmp.eq.s32.totalorder %s13, 0
      %p122 = por %p120, %p121
      %p123 = scmp.ne.s32.totalorder %s112, %s115
      %p124 = scmp.eq.s32.totalorder %s18, 2
      %p125 = por %p123, %p124
      %p126 = scmp.ne.s32.totalorder %s115, %s116
      %p127 = scmp.eq.s32.totalorder %s18, 0
      %p128 = por %p126, %p127
      %p129 = scmp.ne.s32.totalorder %s115, %s116
      %p130 = scmp.eq.s32.totalorder %s19, 2
      %p131 = por %p129, %p130
      %p133 = scmp.ne.s32.totalorder %s116, %s132
      %p134 = scmp.eq.s32.totalorder %s19, 0
      %p135 = por %p133, %p134
      %s136 = ssub.s32 %s21, %s35
      %s137 = ssub.s32 %s22, %s31
      %s138 = sor.u32 %s136, %s137
      %p139 = scmp.eq.s32.totalorder %s138, 0
      %s141 = sadd.s32 %s140, 1
      %s142 = scalar_select %p139, %s140, %s141
      %p145 = pneg %p139
      %p146 = scmp.eq.s32.totalorder %s13, 2
      %p147 = por %p145, %p146
      %p148 = scmp.ne.s32.totalorder %s140, %s143
      %p149 = scmp.eq.s32.totalorder %s13, 0
      %p150 = por %p148, %p149
      %p151 = scmp.ne.s32.totalorder %s140, %s143
      %p152 = scmp.eq.s32.totalorder %s18, 2
      %p153 = por %p151, %p152
      %p154 = scmp.ne.s32.totalorder %s143, %s144
      %p155 = scmp.eq.s32.totalorder %s18, 0
      %p156 = por %p154, %p155
      %p157 = scmp.ne.s32.totalorder %s143, %s144
      %p158 = scmp.eq.s32.totalorder %s19, 2
      %p159 = por %p157, %p158
      %p161 = scmp.ne.s32.totalorder %s144, %s160
      %p162 = scmp.eq.s32.totalorder %s19, 0
      %p163 = por %p161, %p162
      %s164 = ssub.s32 %s21, %s35
      %s165 = ssub.s32 %s20, %s39
      %s166 = sor.u32 %s164, %s165
      %s167 = ssub.s32 %s22, %s31
      %s168 = sor.u32 %s166, %s167
      %p169 = scmp.eq.s32.totalorder %s168, 0
      %s171 = sadd.s32 %s170, 1
      %s172 = scalar_select %p169, %s170, %s171
      %p175 = pneg %p169
      %p176 = scmp.eq.s32.totalorder %s13, 2
      %p177 = por %p175, %p176
      %p178 = scmp.ne.s32.totalorder %s170, %s173
      %p179 = scmp.eq.s32.totalorder %s13, 0
      %p180 = por %p178, %p179
      %p181 = scmp.ne.s32.totalorder %s170, %s173
      %p182 = scmp.eq.s32.totalorder %s18, 2
      %p183 = por %p181, %p182
      %p184 = scmp.ne.s32.totalorder %s173, %s174
      %p185 = scmp.eq.s32.totalorder %s18, 0
      %p186 = por %p184, %p185
      %p187 = scmp.ne.s32.totalorder %s173, %s174
      %p188 = scmp.eq.s32.totalorder %s19, 2
      %p189 = por %p187, %p188
      %p191 = scmp.ne.s32.totalorder %s174, %s190
      %p192 = scmp.eq.s32.totalorder %s19, 0
      %p193 = por %p191, %p192
      %p194 = scmp.le.s32.totalorder 1, %s13
      %p195 = scmp.lt.s32.totalorder %s13, 4
      %p196 = pnand %p194, %p195
      %p197 = pneg %p196
      // Predicated region
      $region9: #{meta_learner_forward.1} parent=5 // pred_check
        _
      $region10: #{meta_learner_forward.1} parent=5 // pred_check_branch
        %199 = sbr.rel (%p196) target = $region12
      $region11: #{meta_learner_forward.1} parent=5 // pred_region
        %s200 = ssub.s32 %s13, 1
        // Predicated region
        $region13: #{meta_learner_forward.1} parent=11 // pred_check
          %p201 = pneg %p58
        $region14: #{meta_learner_forward.1} parent=11 // pred_check_branch
          %203 = sbr.rel (%p201) target = $region16
        $region15: #{meta_learner_forward.1} parent=11 // pred_region
          %s204 = smul.u32 4, %s23
          %s206 = ssub.s32 512, 512
          %207 = vsyncadd [#allocation4], %s206
          %s208 = smul.addr %s204, 128
          %s209 = scalar_lea.hbm %s0, %s208
          %s210 = sshll.u32 [#allocation3], 4
          %s211 = int_to_ptr.vmem [resolvable:$true] %s210
          %216 = dma.hbm_to_vmem [thread:$0]  %s209, 512, %s211, [#allocation4], 128, 128, 8
        $region16: #{meta_learner_forward.1} parent=11 // pred_fallthru
          _
        // Predicated region
        $region17: #{meta_learner_forward.1} parent=11 // pred_check
          %p217 = pneg %p79
        $region18: #{meta_learner_forward.1} parent=11 // pred_check_branch
          %219 = sbr.rel (%p217) target = $region20
        $region19: #{meta_learner_forward.1} parent=11 // pred_region
          %s221 = ssub.s32 256, 256
          %222 = vsyncadd [#allocation6], %s221
          %s223 = sshll.u32 [#allocation5], 4
          %s224 = int_to_ptr.vmem [resolvable:$true] %s223
          %229 = dma.hbm_to_vmem [thread:$0]  %s1, 256, %s224, [#allocation6], 128, 128, 8
        $region20: #{meta_learner_forward.1} parent=11 // pred_fallthru
          _
        // Predicated region
        $region21: #{meta_learner_forward.1} parent=11 // pred_check
          %p230 = pneg %p100
        $region22: #{meta_learner_forward.1} parent=11 // pred_check_branch
          %232 = sbr.rel (%p230) target = $region24
        $region23: #{meta_learner_forward.1} parent=11 // pred_region
          _
        $region24: #{meta_learner_forward.1} parent=11 // pred_fallthru
          _
      $region12: #{meta_learner_forward.1} parent=5 // pred_fallthru
        _
      %p233 = scmp.lt.s32.totalorder %s13, 3
      // Predicated region
      $region25: #{meta_learner_forward.1} parent=5 // pred_check
        %p234 = pneg %p233
      $region26: #{meta_learner_forward.1} parent=5 // pred_check_branch
        %236 = sbr.rel (%p234) target = $region28
      $region27: #{meta_learner_forward.1} parent=5 // pred_region
        // Predicated region
        $region29: #{meta_learner_forward.1} parent=27 // pred_check
          %p237 = pneg %p122
        $region30: #{meta_learner_forward.1} parent=27 // pred_check_branch
          %239 = sbr.rel (%p237) target = $region32
        $region31: #{meta_learner_forward.1} parent=27 // pred_region
          %s240 = sand.u32 %s13, 1
          %s241 = scalar_lea.sflag [#allocation4], %s240
          %s242 = sand.u32 %s112, 1
          %s243 = smul.addr %s242, 32
          %s244 = scalar_lea.vmem [#allocation7], %s243
          %s245 = smul.u32 2, %s22
          %s247 = ssub.s32 512, 512
          %248 = vsyncadd %s241, %s247
          %s249 = smul.addr %s21, 8
          %s250 = sadd.s32 %s245, %s249
          %s251 = smul.addr %s250, 64
          %s252 = scalar_lea.hbm %s3, %s251
          %s253 = sshll.u32 %s244, 4
          %s254 = int_to_ptr.vmem [resolvable:$true] %s253
          %259 = dma.hbm_to_vmem [thread:$0]  %s252, 512, %s254, %s241, 128, 128, 8
        $region32: #{meta_learner_forward.1} parent=27 // pred_fallthru
          _
        // Predicated region
        $region33: #{meta_learner_forward.1} parent=27 // pred_check
          %p260 = pneg %p150
        $region34: #{meta_learner_forward.1} parent=27 // pred_check_branch
          %262 = sbr.rel (%p260) target = $region36
        $region35: #{meta_learner_forward.1} parent=27 // pred_region
          %s263 = smul.u32 2, %s22
          %p264 = scmp.lt.s32.totalorder %s21, 2
          %s265 = scalar_select %p264, %s21, 2
          %p266 = scmp.lt.s32.totalorder %s263, 1
          %s267 = scalar_select %p266, %s263, 1
          %s268 = smul.addr %s265, 2
          %s269 = sadd.s32 %s267, %s268
          %s270 = scalar_lea.vmem %s4, %s269
          %s271 = smul.u32 2, %s22
        $region36: #{meta_learner_forward.1} parent=27 // pred_fallthru
          _
      $region28: #{meta_learner_forward.1} parent=5 // pred_fallthru
        _
      %p272 = scmp.le.s32.totalorder 1, %s13
      %p273 = scmp.lt.s32.totalorder %s13, 4
      %p274 = pnand %p272, %p273
      %p275 = pneg %p274
      // Predicated region
      $region37: #{meta_learner_forward.1} parent=5 // pred_check
        _
      $region38: #{meta_learner_forward.1} parent=5 // pred_check_branch
        %277 = sbr.rel (%p274) target = $region40
      $region39: #{meta_learner_forward.1} parent=5 // pred_region
        %s278 = ssub.s32 %s13, 1
        // Predicated region
        $region41: #{meta_learner_forward.1} parent=39 // pred_check
          %p279 = pneg %p58
        $region42: #{meta_learner_forward.1} parent=39 // pred_check_branch
          %281 = sbr.rel (%p279) target = $region44
        $region43: #{meta_learner_forward.1} parent=39 // pred_region
          %282 = dma.done [#allocation4], 512
        $region44: #{meta_learner_forward.1} parent=39 // pred_fallthru
          _
        // Predicated region
        $region45: #{meta_learner_forward.1} parent=39 // pred_check
          %p283 = pneg %p79
        $region46: #{meta_learner_forward.1} parent=39 // pred_check_branch
          %285 = sbr.rel (%p283) target = $region48
        $region47: #{meta_learner_forward.1} parent=39 // pred_region
          %286 = dma.done [#allocation6], 256
        $region48: #{meta_learner_forward.1} parent=39 // pred_fallthru
          _
        %s287 = sand.u32 %s18, 1
        %s288 = scalar_lea.sflag [#allocation4], %s287
        %s289 = sand.u32 %s115, 1
        %s290 = smul.addr %s289, 32
        %s291 = scalar_lea.vmem [#allocation7], %s290
        // Predicated region
        $region49: #{meta_learner_forward.1} parent=39 // pred_check
          %p292 = pneg %p128
        $region50: #{meta_learner_forward.1} parent=39 // pred_check_branch
          %294 = sbr.rel (%p292) target = $region52
        $region51: #{meta_learner_forward.1} parent=39 // pred_region
          %295 = dma.done %s288, 512
        $region52: #{meta_learner_forward.1} parent=39 // pred_fallthru
          _
        %p296 = pneg %p58
        %p297 = pneg %p55
        %p298 = pneg %p79
        %p299 = pneg %p76
        %p300 = pneg %p100
        %p301 = pneg %p97
        %s302 = sand.u32 %s18, 1
        %s303 = scalar_lea.sflag [#allocation4], %s302
        %s304 = sand.u32 %s115, 1
        %s305 = smul.addr %s304, 32
        %s306 = scalar_lea.vmem [#allocation7], %s305
        %p307 = pneg %p128
        %p308 = pneg %p125
        %s309 = smul.u32 2, %s25
        %p310 = scmp.lt.s32.totalorder %s24, 2
        %s311 = scalar_select %p310, %s24, 2
        %p312 = scmp.lt.s32.totalorder %s309, 1
        %s313 = scalar_select %p312, %s309, 1
        %s314 = smul.addr %s311, 2
        %s315 = sadd.s32 %s313, %s314
        %s316 = scalar_lea.vmem %s4, %s315
        %p317 = pneg %p156
        %p318 = pneg %p153
        %p319 = pneg %p186
        %p320 = pneg %p183
        %s321 = smul.u32 4, %s23
        %s322 = smul.u32 2, %s25
        %p323 = scmp.lt.s32.totalorder %s24, 2
        %s324 = scalar_select %p323, %s24, 2
        %p325 = scmp.lt.s32.totalorder %s321, 3
        %s326 = scalar_select %p325, %s321, 3
        %p327 = scmp.lt.s32.totalorder %s322, 1
        %s328 = scalar_select %p327, %s322, 1
        %s329 = smul.addr %s326, 2
        %s330 = sadd.s32 %s328, %s329
        %s331 = smul.addr %s324, 8
        %s332 = sadd.s32 %s330, %s331
        %s333 = smul.addr %s332, 4
        %s334 = scalar_lea.vmem %s5, %s333
        %s335 = smul.u32 4, %s23
        %s336 = smul.u32 2, %s25
        %s337 = smul.u32 2, %s25
        %p338 = scmp.lt.s32.totalorder %s24, 2
        %s339 = scalar_select %p338, %s24, 2
        %p340 = scmp.lt.s32.totalorder %s337, 1
        %s341 = scalar_select %p340, %s337, 1
        %s342 = smul.addr %s339, 2
        %s343 = sadd.s32 %s341, %s342
        %s344 = scalar_lea.vmem %s4, %s343
        %s345 = smul.u32 2, %s25
        %s346 = smul.u32 4, %s23
        %s347 = smul.u32 2, %s25
        %p348 = scmp.lt.s32.totalorder %s24, 2
        %s349 = scalar_select %p348, %s24, 2
        %p350 = scmp.lt.s32.totalorder %s346, 3
        %s351 = scalar_select %p350, %s346, 3
        %p352 = scmp.lt.s32.totalorder %s347, 1
        %s353 = scalar_select %p352, %s347, 1
        %s354 = smul.addr %s351, 2
        %s355 = sadd.s32 %s353, %s354
        %s356 = smul.addr %s349, 8
        %s357 = sadd.s32 %s355, %s356
        %s358 = smul.addr %s357, 4
        %s359 = scalar_lea.vmem %s5, %s358
        %s360 = smul.u32 4, %s23
        %s361 = smul.u32 2, %s25
        %p363 = scmp.eq.s32.totalorder %s24, 0
        %p364 = scmp.eq.s32.totalorder %s25, 0
        %p365 = pnand %p363, %p364
        %p366 = pneg %p365
        // Predicated region
        $region53: #{meta_learner_forward.1} parent=39 // pred_check
          _
        $region54: #{meta_learner_forward.1} parent=39 // pred_check_branch
          %368 = sbr.rel (%p365) target = $region56
        $region55: #{meta_learner_forward.1} parent=39 // pred_region
          %v369 = vld [vmem:[#allocation3] sm:$0xff]
          %v370 = vld [vmem:[#allocation3 + $0x8] sm:$0xff]
          %v371 = vld [vmem:[#allocation3 + $0x10] sm:$0xff]
          %v372 = vld [vmem:[#allocation3 + $0x18] sm:$0xff]
          %v373 = vld [vmem:[#allocation5] sm:$0xff]
          %v374 = vld [vmem:[#allocation5 + $0x8] sm:$0xff]
          %v375 = vld [vmem:[%s2] sm:$0x1]
          %v377 = vlaneseq
          %v378 = vshrl.u32 %v377, 7
          %v379 = vsub.s32 0, %v378
          %v380 = vrot.slane %v375, %v379
          %vm382 = vcmask 130048
          %v384 = vsel %vm382, %v369, 0
          %v387 = vsel %vm382, %v370, 0
          %v390 = vsel %vm382, %v371, 0
          %v393 = vsel %vm382, %v372, 0
          %395 = vmatprep.subr.mxu0 0.0
          %396 = vmatpush1.msra.mxu0 %v373
          %397 = vmatprep.subr.mxu0 0.0
          %398 = vmatpush1.msra.mxu0 %v374
          %399 = vmatprep.subr.mxu0 0.0
          %400 = vmatpush1.msra.mxu0 0.0
          %401 = vmatprep.subr.mxu0 0.0
          %402 = vmatpush1.msra.mxu0 0.0
          %403 = vmatprep.subr.mxu0 0.0
          %404 = vmatpush1.msra.mxu0 0.0
          %405 = vmatprep.subr.mxu0 0.0
          %406 = vmatpush1.msra.mxu0 0.0
          %407 = vmatprep.subr.mxu0 0.0
          %408 = vmatpush1.msra.mxu0 0.0
          %409 = vmatprep.subr.mxu0 0.0
          %410 = vmatpush1.msra.mxu0 0.0
          %411 = vmatprep.subr.mxu0 0.0
          %412 = vmatpush1.msra.mxu0 0.0
          %413 = vmatprep.subr.mxu0 0.0
          %414 = vmatpush1.msra.mxu0 0.0
          %415 = vmatprep.subr.mxu0 0.0
          %416 = vmatpush1.msra.mxu0 0.0
          %417 = vmatprep.subr.mxu0 0.0
          %418 = vmatpush1.msra.mxu0 0.0
          %419 = vmatprep.subr.mxu0 0.0
          %420 = vmatpush1.msra.mxu0 0.0
          %421 = vmatprep.subr.mxu0 0.0
          %422 = vmatpush1.msra.mxu0 0.0
          %423 = vmatprep.subr.mxu0 0.0
          %424 = vmatpush1.msra.mxu0 0.0
          %425 = vmatprep.subr.mxu0 0.0
          %426 = vmatpush1.msra.mxu0 0.0
          %427 = vmatprep.subr.mxu0 0.0
          %428 = vmatpush1.msra.mxu0 0.0
          %429 = vmatprep.subr.mxu0 0.0
          %430 = vmatpush1.msra.mxu0 0.0
          %431 = vmatprep.subr.mxu0 0.0
          %432 = vmatpush1.msra.mxu0 0.0
          %433 = vmatprep.subr.mxu0 0.0
          %434 = vmatpush1.msra.mxu0 0.0
          %435 = vmatprep.subr.mxu0 0.0
          %436 = vmatpush1.msra.mxu0 0.0
          %437 = vmatprep.subr.mxu0 0.0
          %438 = vmatpush1.msra.mxu0 0.0
          %439 = vmatprep.subr.mxu0 0.0
          %440 = vmatpush1.msra.mxu0 0.0
          %441 = vmatprep.subr.mxu0 0.0
          %442 = vmatpush1.msra.mxu0 0.0
          %443 = vmatprep.subr.mxu0 0.0
          %444 = vmatpush1.msra.mxu0 0.0
          %445 = vmatprep.subr.mxu0 0.0
          %446 = vmatpush1.msra.mxu0 0.0
          %447 = vmatprep.subr.mxu0 0.0
          %448 = vmatpush1.msra.mxu0 0.0
          %449 = vmatprep.subr.mxu0 0.0
          %450 = vmatpush1.msra.mxu0 0.0
          %451 = vmatprep.subr.mxu0 0.0
          %452 = vmatpush1.msra.mxu0 0.0
          %453 = vmatprep.subr.mxu0 0.0
          %454 = vmatpush1.msra.mxu0 0.0
          %455 = vmatprep.subr.mxu0 0.0
          %456 = vmatpush1.msra.mxu0 0.0
          %457 = vmatprep.subr.mxu0 0.0
          %458 = vmatpush1.msra.mxu0 0.0
          %459 = vmatprep.mubr.f32.mxu0 0.0
          %460 = vmatmul.mubr.f32.gmra.mrb[0].mxu0 %v384
          %v461 = vpop.f32.mrb[0].mxu0
          %v462 = vadd.f32 %v380, %v461
          %v463 = vpop.f32.mrb[0].mxu0
          %464 = vmatprep.mubr.f32.mxu0 0.0
          %465 = vmatmul.mubr.f32.gmra.mrb[0].mxu0 %v387
          %v466 = vpop.f32.mrb[0].mxu0
          %v467 = vadd.f32 %v380, %v466
          %v468 = vpop.f32.mrb[0].mxu0
          %469 = vmatprep.mubr.f32.mxu0 0.0
          %470 = vmatmul.mubr.f32.gmra.mrb[0].mxu0 %v390
          %v471 = vpop.f32.mrb[0].mxu0
          %v472 = vadd.f32 %v380, %v471
          %v473 = vpop.f32.mrb[0].mxu0
          %474 = vmatprep.mubr.f32.mxu0 0.0
          %475 = vmatmul.mubr.f32.gmra.mrb[0].mxu0 %v393
          %v476 = vpop.f32.mrb[0].mxu0
          %v477 = vadd.f32 %v380, %v476
          %v478 = vpop.f32.mrb[0].mxu0
          %479 = vdwg.mxu0
          %v480 = vmax.f32 %v462, 0.0
          %v481 = vmax.f32 %v467, 0.0
          %v482 = vmax.f32 %v472, 0.0
          %v483 = vmax.f32 %v477, 0.0
          %v484 = vpack.c.bf16 %v481, %v480
          %v485 = vpack.c.bf16 %v483, %v482
          %vm486 = vcmask 261120
          %487 = vst.msk [vmem:[#allocation2] sm:$0xff] %vm486, %v484
          %488 = vst.msk [vmem:[#allocation2 + $0x8] sm:$0xff] %vm486, %v485
        $region56: #{meta_learner_forward.1} parent=39 // pred_fallthru
          _
        %v489 = vld [vmem:[#allocation2] sm:$0xff]
        %v490 = vld [vmem:[#allocation2 + $0x8] sm:$0xff]
        %v491 = vld [vmem:[%s291] sm:$0xff]
        %v492 = vld [vmem:[%s291 + $0x8] sm:$0xff]
        %v493 = vld [vmem:[%s291 + $0x10] sm:$0xff]
        %v494 = vld [vmem:[%s291 + $0x18] sm:$0xff]
        %v495 = vld [vmem:[%s344] sm:$0x3]
        %v497 = vlaneseq
        %v498 = vshrl.u32 %v497, 7
        %v499 = vsub.s32 0, %v498
        %v500 = vrot.slane %v495, %v499
        %v501 = vlaneseq
        %v502 = vshrl.u32 %v501, 7
        %v503 = vsub.s32 1, %v502
        %v504 = vrot.slane %v495, %v503
        %v511 = vunpack.c.l.b16 %v491
        %v512 = vunpack.c.h.b16 %v491
        %v513 = vunpack.c.l.b16 %v492
        %v514 = vunpack.c.h.b16 %v492
        %v515 = vunpack.c.l.b16 %v493
        %v516 = vunpack.c.h.b16 %v493
        %v517 = vunpack.c.l.b16 %v494
        %v518 = vunpack.c.h.b16 %v494
        %v519 = vpack.c.b16 %v513, %v511
        %v520 = vpack.c.b16 %v514, %v512
        %v521 = vpack.c.b16 %v517, %v515
        %v522 = vpack.c.b16 %v518, %v516
        %vm527 = vcmask 261120
        %v529 = vsel %vm527, %v489, 0
        %v532 = vsel %vm527, %v490, 0
        %534 = vmatprep.subr.bf16.mxu0 %v520
        %535 = vmatpush1.bf16.msra.mxu0 %v519
        %536 = vmatprep.subr.bf16.mxu0 %v522
        %537 = vmatpush1.bf16.msra.mxu0 %v521
        %538 = vmatprep.subr.bf16.mxu0 0
        %539 = vmatpush1.bf16.msra.mxu0 0
        %540 = vmatprep.subr.bf16.mxu0 0
        %541 = vmatpush1.bf16.msra.mxu0 0
        %542 = vmatprep.subr.bf16.mxu0 0
        %543 = vmatpush1.bf16.msra.mxu0 0
        %544 = vmatprep.subr.bf16.mxu0 0
        %545 = vmatpush1.bf16.msra.mxu0 0
        %546 = vmatprep.subr.bf16.mxu0 0
        %547 = vmatpush1.bf16.msra.mxu0 0
        %548 = vmatprep.subr.bf16.mxu0 0
        %549 = vmatpush1.bf16.msra.mxu0 0
        %550 = vmatprep.subr.bf16.mxu0 0
        %551 = vmatpush1.bf16.msra.mxu0 0
        %552 = vmatprep.subr.bf16.mxu0 0
        %553 = vmatpush1.bf16.msra.mxu0 0
        %554 = vmatprep.subr.bf16.mxu0 0
        %555 = vmatpush1.bf16.msra.mxu0 0
        %556 = vmatprep.subr.bf16.mxu0 0
        %557 = vmatpush1.bf16.msra.mxu0 0
        %558 = vmatprep.subr.bf16.mxu0 0
        %559 = vmatpush1.bf16.msra.mxu0 0
        %560 = vmatprep.subr.bf16.mxu0 0
        %561 = vmatpush1.bf16.msra.mxu0 0
        %562 = vmatprep.subr.bf16.mxu0 0
        %563 = vmatpush1.bf16.msra.mxu0 0
        %564 = vmatprep.subr.bf16.mxu0 0
        %565 = vmatpush1.bf16.msra.mxu0 0
        %566 = vmatprep.mubr.bf16.mxu0 0
        %567 = vmatmul.mubr.bf16.gmra.mrb[0].mxu0 %v529
        %v568 = vpop.f32.mrb[0].mxu0
        %v569 = vadd.f32 %v500, %v568
        %v570 = vpop.f32.mrb[0].mxu0
        %v571 = vadd.f32 %v504, %v570
        %v572 = vpop.f32.mrb[0].mxu0
        %v573 = vadd.f32 %v500, %v572
        %v574 = vpop.f32.mrb[0].mxu0
        %v575 = vadd.f32 %v504, %v574
        %576 = vmatprep.mubr.bf16.mxu0 0
        %577 = vmatmul.mubr.bf16.gmra.mrb[0].mxu0 %v532
        %v578 = vpop.f32.mrb[0].mxu0
        %v579 = vadd.f32 %v500, %v578
        %v580 = vpop.f32.mrb[0].mxu0
        %v581 = vadd.f32 %v504, %v580
        %v582 = vpop.f32.mrb[0].mxu0
        %v583 = vadd.f32 %v500, %v582
        %v584 = vpop.f32.mrb[0].mxu0
        %v585 = vadd.f32 %v504, %v584
        %586 = vdwg.mxu0
        %v587 = vpack.c.bf16 %v573, %v569
        %v588 = vpack.c.bf16 %v575, %v571
        %v589 = vpack.c.bf16 %v583, %v579
        %v590 = vpack.c.bf16 %v585, %v581
        %v595 = vunpack.c.l.b16 %v587
        %v596 = vunpack.c.l.b16 %v588
        %v597 = vunpack.c.h.b16 %v587
        %v598 = vunpack.c.h.b16 %v588
        %v599 = vunpack.c.l.b16 %v589
        %v600 = vunpack.c.l.b16 %v590
        %v601 = vunpack.c.h.b16 %v589
        %v602 = vunpack.c.h.b16 %v590
        %v603 = vpack.c.b16 %v596, %v595
        %v604 = vpack.c.b16 %v598, %v597
        %v605 = vpack.c.b16 %v600, %v599
        %v606 = vpack.c.b16 %v602, %v601
        %611 = vst [vmem:[%s359] sm:$0xff] %v603
        %612 = vst [vmem:[%s359 + $0x8] sm:$0xff] %v604
        %613 = vst [vmem:[%s359 + $0x10] sm:$0xff] %v605
        %614 = vst [vmem:[%s359 + $0x18] sm:$0xff] %v606
        %s615 = smul.u32 4, %s23
        %s616 = smul.u32 2, %s25
        %p617 = scmp.lt.s32.totalorder %s24, 2
        %s618 = scalar_select %p617, %s24, 2
        %p619 = scmp.lt.s32.totalorder %s615, 3
        %s620 = scalar_select %p619, %s615, 3
        %p621 = scmp.lt.s32.totalorder %s616, 1
        %s622 = scalar_select %p621, %s616, 1
        %s623 = smul.addr %s620, 2
        %s624 = sadd.s32 %s622, %s623
        %s625 = smul.addr %s618, 8
        %s626 = sadd.s32 %s624, %s625
        %s627 = smul.addr %s626, 4
        %s628 = scalar_lea.vmem %s5, %s627
        // Predicated region
        $region57: #{meta_learner_forward.1} parent=39 // pred_check
          %p629 = pneg %p183
        $region58: #{meta_learner_forward.1} parent=39 // pred_check_branch
          %631 = sbr.rel (%p629) target = $region60
        $region59: #{meta_learner_forward.1} parent=39 // pred_region
          %s632 = smul.u32 4, %s23
          %s633 = smul.u32 2, %s25
        $region60: #{meta_learner_forward.1} parent=39 // pred_fallthru
          _
      $region40: #{meta_learner_forward.1} parent=5 // pred_fallthru
        _
      %p634 = scmp.le.s32.totalorder 2, %s13
      // Predicated region
      $region61: #{meta_learner_forward.1} parent=5 // pred_check
        %p635 = pneg %p634
      $region62: #{meta_learner_forward.1} parent=5 // pred_check_branch
        %637 = sbr.rel (%p635) target = $region64
      $region63: #{meta_learner_forward.1} parent=5 // pred_region
        %s638 = ssub.s32 %s13, 2
        // Predicated region
        $region65: #{meta_learner_forward.1} parent=63 // pred_check
          %p639 = pneg %p189
        $region66: #{meta_learner_forward.1} parent=63 // pred_check_branch
          %641 = sbr.rel (%p639) target = $region68
        $region67: #{meta_learner_forward.1} parent=63 // pred_region
          %s642 = smul.u32 4, %s26
          %s643 = smul.u32 2, %s28
          %p644 = scmp.lt.s32.totalorder %s27, 2
          %s645 = scalar_select %p644, %s27, 2
          %p646 = scmp.lt.s32.totalorder %s642, 3
          %s647 = scalar_select %p646, %s642, 3
          %p648 = scmp.lt.s32.totalorder %s643, 1
          %s649 = scalar_select %p648, %s643, 1
          %s650 = smul.addr %s647, 2
          %s651 = sadd.s32 %s649, %s650
          %s652 = smul.addr %s645, 8
          %s653 = sadd.s32 %s651, %s652
          %s654 = smul.addr %s653, 4
          %s655 = scalar_lea.vmem %s5, %s654
        $region68: #{meta_learner_forward.1} parent=63 // pred_fallthru
          _
      $region64: #{meta_learner_forward.1} parent=5 // pred_fallthru
        _
    $region6: #{meta_learner_forward.1} parent=1 // loop_footer
      %s17 = sadd.s32 1, %s13
    $region7: #{meta_learner_forward.1} parent=1 // loop_footer_branch
      %12 = sbr.rel target = $region3
    $region8: #{meta_learner_forward.1} parent=1 // loop_exit
      _
    %656 = vsyncpa [#allocation4], 1
    %s657 = scalar_lea.sflag [#allocation4], 1
    %658 = vsyncpa %s657, 1
    %659 = vsyncpa [#allocation6], 1

</llo_original>
